<compile_context>
chip_gen: v7x
topology: tpu7x:2x2x1
jax: 0.10.0
libtpu: 0.0.40
codegen_flags: <defaults>
</compile_context>

<pallas_src>
import jax
import jax.numpy as jnp
import numpy as np
from jax.experimental import pallas as pl
from jax.experimental.pallas import tpu as pltpu


def residual_block(x_packed, w1, b1, w2, b2, *, H2, L):
    """x_packed: (N, H2, L) f32, lane = row_parity*W*C + pixel*C + channel."""
    N = x_packed.shape[0]

    def kernel(x_ref, w1_ref, b1_ref, w2_ref, b2_ref, o_ref):
        x = x_ref[0].astype(jnp.float32)                          # (H2, L)

        def conv3x3(a, w_ref):
            # H reflection pad on super-rows: edge duplication is exact here
            # because the host-built weights only read the parity half of each
            # pad super-row that equals the correct reflected image row.
            ap = jnp.concatenate([a[0:1], a, a[H2 - 1:H2]], axis=0)  # (H2+2, L)
            ap = ap.astype(jnp.bfloat16)        # bf16 MXU operands, f32 accum
            acc = jnp.zeros((H2, L), jnp.float32)
            for dt in range(3):                 # 3 accumulating MXU dots
                acc += jnp.dot(ap[dt:dt + H2], w_ref[dt],
                               preferred_element_type=jnp.float32)
            return acc

        # Conv1 (BN1 scale + W-reflect-pad folded into weights) -> bias -> ReLU.
        h = conv3x3(x, w1_ref)
        h = jnp.maximum(h + b1_ref[...], 0.0)
        # TODO(synk): Dropout(0.5) is identity in eval mode; training-mode RNG
        # is not reproduced here.

        # Conv2 (BN2 scale folded) -> bias.
        h = conv3x3(h, w2_ref)
        h = h + b2_ref[...]

        # Residual add; dense 128-lane store.
        o_ref[0] = (x + h).astype(o_ref.dtype)

    return pl.pallas_call(
        kernel,
        out_shape=jax.ShapeDtypeStruct((N, H2, L), x_packed.dtype),
        grid_spec=pltpu.PrefetchScalarGridSpec(
            num_scalar_prefetch=0,
            grid=(N,),                       # one image per grid step
            in_specs=[
                pl.BlockSpec((1, H2, L), lambda b: (b, 0, 0)),
                # Constant index_maps -> weights/biases DMA'd once, resident.
                pl.BlockSpec((3, L, L), lambda b: (0, 0, 0)),
                pl.BlockSpec((1, L), lambda b: (0, 0)),
                pl.BlockSpec((3, L, L), lambda b: (0, 0, 0)),
                pl.BlockSpec((1, L), lambda b: (0, 0)),
            ],
            out_specs=pl.BlockSpec((1, H2, L), lambda b: (b, 0, 0)),
        ),
        compiler_params=pltpu.CompilerParams(
            dimension_semantics=("parallel",)),   # v7x: one image per TC
    )(x_packed, w1, b1, w2, b2)


# ----------------------------- host-side glue -----------------------------

def _fold_bn(gamma, beta, mean, var, eps):
    scale = np.asarray(gamma, np.float32) / np.sqrt(np.asarray(var, np.float32) + eps)
    bias = np.asarray(beta, np.float32) - np.asarray(mean, np.float32) * scale
    return scale, bias


def _build_row_pair_weights(w_oihw, out_scale, W):
    """Build 3 bf16 (2*W*Cin, 2*W*Cout) matrices Wt[dt] implementing a 3x3
    cross-correlation on the row-pair-packed lane layout
        lane = row_parity * W * C + pixel * C + channel,
    with the W reflection pad and the per-output-channel BN scale folded in:
        out_super_row[t] = sum_dt  in_super_row_padded[t + dt] @ Wt[dt].
    """
    w = np.asarray(w_oihw, np.float32)                    # (Cout, Cin, 3, 3)
    Cout, Cin = w.shape[0], w.shape[1]
    w_hwio = (np.transpose(w, (2, 3, 1, 0))
              * np.asarray(out_scale, np.float32)[None, None, None, :])
    L_in, L_out = 2 * W * Cin, 2 * W * Cout
    Wt = np.zeros((3, L_in, L_out), np.float32)

    def reflect(p):                    # padded column index -> source pixel
        return 1 if p == 0 else (W - 2 if p == W + 1 else p - 1)

    for dt in range(3):
        for ri in range(2):            # parity of input row inside its pair
            for ro in range(2):        # parity of output row inside its pair
                dy = 2 * dt + ri - ro - 1
                if not 0 <= dy <= 2:
                    continue
                for j_out in range(W):
                    for dx in range(3):
                        j_in = reflect(j_out + dx)
                        r0 = ri * W * Cin + j_in * Cin
                        c0 = ro * W * Cout + j_out * Cout
                        Wt[dt, r0:r0 + Cin, c0:c0 + Cout] += w_hwio[dy, dx]
    return jnp.asarray(Wt, jnp.bfloat16)                  # bf16 MXU operands


def reference_nchw(x, w1_oihw, w2_oihw, g1, b1, m1, v1, g2, b2, m2, v2, eps):
    """Pure-JAX reference matching PyTorch eval-mode semantics (NCHW)."""
    def conv(a, w):
        ap = jnp.pad(a, ((0, 0), (0, 0), (1, 1), (1, 1)), mode="reflect")
        return jax.lax.conv_general_dilated(
            ap, w, window_strides=(1, 1), padding="VALID",
            dimension_numbers=("NCHW", "OIHW", "NCHW"))

    def bn(a, g, b, m, v):
        return ((a - m[None, :, None, None]) /
                jnp.sqrt(v + eps)[None, :, None, None] *
                g[None, :, None, None] + b[None, :, None, None])

    h = conv(x, w1_oihw)
    h = jnp.maximum(bn(h, g1, b1, m1, v1), 0.0)
    h = conv(h, w2_oihw)
    h = bn(h, g2, b2, m2, v2)
    return x + h


if __name__ == "__main__":
    key = jax.random.PRNGKey(0)
    ks = jax.random.split(key, 12)

    N, C, H, W = 2, 4, 16, 16  # num_filters = 4
    eps = 1e-5
    H2, L = H // 2, 2 * W * C  # 8, 128  (128-wide lane axis)

    x_nchw = jax.random.normal(ks[0], (N, C, H, W), jnp.float32)

    # Conv weights in PyTorch OIHW layout, deterministic init.
    w1_oihw = jax.random.normal(ks[1], (C, C, 3, 3), jnp.float32) * 0.1
    w2_oihw = jax.random.normal(ks[2], (C, C, 3, 3), jnp.float32) * 0.1

    # BatchNorm (eval mode): gamma, beta, running_mean, running_var.
    g1 = jax.random.normal(ks[3], (C,), jnp.float32) * 0.1 + 1.0
    b1 = jax.random.normal(ks[4], (C,), jnp.float32) * 0.1
    m1 = jax.random.normal(ks[5], (C,), jnp.float32) * 0.1
    v1 = jax.random.uniform(ks[6], (C,), jnp.float32, 0.5, 1.5)
    g2 = jax.random.normal(ks[7], (C,), jnp.float32) * 0.1 + 1.0
    b2 = jax.random.normal(ks[8], (C,), jnp.float32) * 0.1
    m2 = jax.random.normal(ks[9], (C,), jnp.float32) * 0.1
    v2 = jax.random.uniform(ks[10], (C,), jnp.float32, 0.5, 1.5)

    # Fold BN into weights/biases, build bf16 conv matrices (free host prep).
    s1, bb1 = _fold_bn(g1, b1, m1, v1, eps)
    s2, bb2 = _fold_bn(g2, b2, m2, v2, eps)
    w1_pack = _build_row_pair_weights(w1_oihw, s1, W)
    w2_pack = _build_row_pair_weights(w2_oihw, s2, W)
    bias1 = jnp.asarray(np.tile(bb1, 2 * W).reshape(1, L), jnp.float32)
    bias2 = jnp.asarray(np.tile(bb2, 2 * W).reshape(1, L), jnp.float32)

    # Row-pair lane packing at the pallas_call boundary: (N, H2, 2*W*C).
    x_packed = jnp.transpose(x_nchw, (0, 2, 3, 1)).reshape(N, H2, L)

    out_packed = residual_block(x_packed, w1_pack, bias1, w2_pack, bias2,
                                H2=H2, L=L)
    out_nchw = jnp.transpose(out_packed.reshape(N, H, W, C), (0, 3, 1, 2))
    out_nchw = jax.block_until_ready(out_nchw)

    ref = reference_nchw(x_nchw, w1_oihw, w2_oihw,
                         g1, b1, m1, v1, g2, b2, m2, v2, eps)
    ref = jax.block_until_ready(ref)

    # bf16 MXU operands (f32 accumulation) -> loosened tolerance vs. f32 ref.
    np.testing.assert_allclose(np.asarray(out_nchw), np.asarray(ref),
                               rtol=3e-2, atol=3e-2)
    print("KERNEL_OK")
</pallas_src>

<mosaic_0001>
module attributes {stable_mosaic.version = 11 : i64} {
  func.func @kernel(%arg0: i32, %arg1: memref<1x8x128xf32, #tpu.memory_space<vmem>>, %arg2: memref<3x128x128xbf16, #tpu.memory_space<vmem>>, %arg3: memref<1x128xf32, #tpu.memory_space<vmem>>, %arg4: memref<3x128x128xbf16, #tpu.memory_space<vmem>>, %arg5: memref<1x128xf32, #tpu.memory_space<vmem>>, %arg6: memref<1x8x128xf32, #tpu.memory_space<vmem>>) attributes {dimension_semantics = [#tpu.dimension_semantics<parallel>], iteration_bounds = array<i64: 2>, scalar_prefetch = 0 : i64, scratch_operands = 0 : i64, tpu.core_type = #tpu.core_type<tc>, window_params = [{transform_indices = @transform_0, window_bounds = array<i64: 1, 8, 128>}, {pipeline_mode = #tpu.pipeline_mode<synchronous>, transform_indices = @transform_1, window_bounds = array<i64: 3, 128, 128>}, {pipeline_mode = #tpu.pipeline_mode<synchronous>, transform_indices = @transform_2, window_bounds = array<i64: 1, 128>}, {pipeline_mode = #tpu.pipeline_mode<synchronous>, transform_indices = @transform_3, window_bounds = array<i64: 3, 128, 128>}, {pipeline_mode = #tpu.pipeline_mode<synchronous>, transform_indices = @transform_4, window_bounds = array<i64: 1, 128>}, {transform_indices = @transform_5, window_bounds = array<i64: 1, 8, 128>}]} {
    %c0 = arith.constant 0 : index
    %c0_0 = arith.constant 0 : index
    %c0_1 = arith.constant 0 : index
    %0 = vector.load %arg1[%c0, %c0_0, %c0_1] : memref<1x8x128xf32, #tpu.memory_space<vmem>>, vector<1x8x128xf32>
    %1 = vector.shape_cast %0 : vector<1x8x128xf32> to vector<8x128xf32>
    %2 = vector.extract_strided_slice %1 {offsets = [0, 0], sizes = [1, 128], strides = [1, 1]} : vector<8x128xf32> to vector<1x128xf32>
    %3 = vector.extract_strided_slice %1 {offsets = [7, 0], sizes = [1, 128], strides = [1, 1]} : vector<8x128xf32> to vector<1x128xf32>
    %4 = tpu.concatenate %2, %1, %3 in 0 : vector<1x128xf32>, vector<8x128xf32>, vector<1x128xf32> -> vector<10x128xf32>
    %5 = arith.truncf %4 : vector<10x128xf32> to vector<10x128xbf16>
    %cst = arith.constant 0.000000e+00 : f32
    %6 = vector.broadcast %cst : f32 to vector<8x128xf32>
    %7 = vector.extract_strided_slice %5 {offsets = [0, 0], sizes = [8, 128], strides = [1, 1]} : vector<10x128xbf16> to vector<8x128xbf16>
    %c0_2 = arith.constant 0 : index
    %c0_3 = arith.constant 0 : index
    %c0_4 = arith.constant 0 : index
    %8 = vector.load %arg2[%c0_2, %c0_3, %c0_4] : memref<3x128x128xbf16, #tpu.memory_space<vmem>>, vector<1x128x128xbf16>
    %9 = vector.shape_cast %8 : vector<1x128x128xbf16> to vector<128x128xbf16>
    %cst_5 = arith.constant dense<0.000000e+00> : vector<8x128xf32>
    %10 = tpu.matmul %7, %9, %cst_5 {dimension_numbers = #tpu.dot_dimension_numbers<[1], [0], [0], [1], [0, 0, 1, 1], [], []>} : vector<8x128xbf16>, vector<128x128xbf16>, vector<8x128xf32> -> vector<8x128xf32>
    %11 = arith.addf %6, %10 : vector<8x128xf32>
    %12 = vector.extract_strided_slice %5 {offsets = [1, 0], sizes = [8, 128], strides = [1, 1]} : vector<10x128xbf16> to vector<8x128xbf16>
    %c1 = arith.constant 1 : index
    %c0_6 = arith.constant 0 : index
    %c0_7 = arith.constant 0 : index
    %13 = vector.load %arg2[%c1, %c0_6, %c0_7] : memref<3x128x128xbf16, #tpu.memory_space<vmem>>, vector<1x128x128xbf16>
    %14 = vector.shape_cast %13 : vector<1x128x128xbf16> to vector<128x128xbf16>
    %cst_8 = arith.constant dense<0.000000e+00> : vector<8x128xf32>
    %15 = tpu.matmul %12, %14, %cst_8 {dimension_numbers = #tpu.dot_dimension_numbers<[1], [0], [0], [1], [0, 0, 1, 1], [], []>} : vector<8x128xbf16>, vector<128x128xbf16>, vector<8x128xf32> -> vector<8x128xf32>
    %16 = arith.addf %11, %15 : vector<8x128xf32>
    %17 = vector.extract_strided_slice %5 {offsets = [2, 0], sizes = [8, 128], strides = [1, 1]} : vector<10x128xbf16> to vector<8x128xbf16>
    %c2 = arith.constant 2 : index
    %c0_9 = arith.constant 0 : index
    %c0_10 = arith.constant 0 : index
    %18 = vector.load %arg2[%c2, %c0_9, %c0_10] : memref<3x128x128xbf16, #tpu.memory_space<vmem>>, vector<1x128x128xbf16>
    %19 = vector.shape_cast %18 : vector<1x128x128xbf16> to vector<128x128xbf16>
    %cst_11 = arith.constant dense<0.000000e+00> : vector<8x128xf32>
    %20 = tpu.matmul %17, %19, %cst_11 {dimension_numbers = #tpu.dot_dimension_numbers<[1], [0], [0], [1], [0, 0, 1, 1], [], []>} : vector<8x128xbf16>, vector<128x128xbf16>, vector<8x128xf32> -> vector<8x128xf32>
    %21 = arith.addf %16, %20 : vector<8x128xf32>
    %c0_12 = arith.constant 0 : index
    %c0_13 = arith.constant 0 : index
    %22 = vector.load %arg3[%c0_12, %c0_13] : memref<1x128xf32, #tpu.memory_space<vmem>>, vector<1x128xf32>
    %23 = vector.broadcast %22 : vector<1x128xf32> to vector<8x128xf32>
    %24 = arith.addf %21, %23 : vector<8x128xf32>
    %cst_14 = arith.constant 0.000000e+00 : f32
    %25 = vector.broadcast %cst_14 : f32 to vector<8x128xf32>
    %26 = arith.maximumf %24, %25 : vector<8x128xf32>
    %27 = vector.extract_strided_slice %26 {offsets = [0, 0], sizes = [1, 128], strides = [1, 1]} : vector<8x128xf32> to vector<1x128xf32>
    %28 = vector.extract_strided_slice %26 {offsets = [7, 0], sizes = [1, 128], strides = [1, 1]} : vector<8x128xf32> to vector<1x128xf32>
    %29 = tpu.concatenate %27, %26, %28 in 0 : vector<1x128xf32>, vector<8x128xf32>, vector<1x128xf32> -> vector<10x128xf32>
    %30 = arith.truncf %29 : vector<10x128xf32> to vector<10x128xbf16>
    %cst_15 = arith.constant 0.000000e+00 : f32
    %31 = vector.broadcast %cst_15 : f32 to vector<8x128xf32>
    %32 = vector.extract_strided_slice %30 {offsets = [0, 0], sizes = [8, 128], strides = [1, 1]} : vector<10x128xbf16> to vector<8x128xbf16>
    %c0_16 = arith.constant 0 : index
    %c0_17 = arith.constant 0 : index
    %c0_18 = arith.constant 0 : index
    %33 = vector.load %arg4[%c0_16, %c0_17, %c0_18] : memref<3x128x128xbf16, #tpu.memory_space<vmem>>, vector<1x128x128xbf16>
    %34 = vector.shape_cast %33 : vector<1x128x128xbf16> to vector<128x128xbf16>
    %cst_19 = arith.constant dense<0.000000e+00> : vector<8x128xf32>
    %35 = tpu.matmul %32, %34, %cst_19 {dimension_numbers = #tpu.dot_dimension_numbers<[1], [0], [0], [1], [0, 0, 1, 1], [], []>} : vector<8x128xbf16>, vector<128x128xbf16>, vector<8x128xf32> -> vector<8x128xf32>
    %36 = arith.addf %31, %35 : vector<8x128xf32>
    %37 = vector.extract_strided_slice %30 {offsets = [1, 0], sizes = [8, 128], strides = [1, 1]} : vector<10x128xbf16> to vector<8x128xbf16>
    %c1_20 = arith.constant 1 : index
    %c0_21 = arith.constant 0 : index
    %c0_22 = arith.constant 0 : index
    %38 = vector.load %arg4[%c1_20, %c0_21, %c0_22] : memref<3x128x128xbf16, #tpu.memory_space<vmem>>, vector<1x128x128xbf16>
    %39 = vector.shape_cast %38 : vector<1x128x128xbf16> to vector<128x128xbf16>
    %cst_23 = arith.constant dense<0.000000e+00> : vector<8x128xf32>
    %40 = tpu.matmul %37, %39, %cst_23 {dimension_numbers = #tpu.dot_dimension_numbers<[1], [0], [0], [1], [0, 0, 1, 1], [], []>} : vector<8x128xbf16>, vector<128x128xbf16>, vector<8x128xf32> -> vector<8x128xf32>
    %41 = arith.addf %36, %40 : vector<8x128xf32>
    %42 = vector.extract_strided_slice %30 {offsets = [2, 0], sizes = [8, 128], strides = [1, 1]} : vector<10x128xbf16> to vector<8x128xbf16>
    %c2_24 = arith.constant 2 : index
    %c0_25 = arith.constant 0 : index
    %c0_26 = arith.constant 0 : index
    %43 = vector.load %arg4[%c2_24, %c0_25, %c0_26] : memref<3x128x128xbf16, #tpu.memory_space<vmem>>, vector<1x128x128xbf16>
    %44 = vector.shape_cast %43 : vector<1x128x128xbf16> to vector<128x128xbf16>
    %cst_27 = arith.constant dense<0.000000e+00> : vector<8x128xf32>
    %45 = tpu.matmul %42, %44, %cst_27 {dimension_numbers = #tpu.dot_dimension_numbers<[1], [0], [0], [1], [0, 0, 1, 1], [], []>} : vector<8x128xbf16>, vector<128x128xbf16>, vector<8x128xf32> -> vector<8x128xf32>
    %46 = arith.addf %41, %45 : vector<8x128xf32>
    %c0_28 = arith.constant 0 : index
    %c0_29 = arith.constant 0 : index
    %47 = vector.load %arg5[%c0_28, %c0_29] : memref<1x128xf32, #tpu.memory_space<vmem>>, vector<1x128xf32>
    %48 = vector.broadcast %47 : vector<1x128xf32> to vector<8x128xf32>
    %49 = arith.addf %46, %48 : vector<8x128xf32>
    %50 = arith.addf %1, %49 : vector<8x128xf32>
    %c0_30 = arith.constant 0 : index
    %c0_31 = arith.constant 0 : index
    %c0_32 = arith.constant 0 : index
    %51 = vector.load %arg6[%c0_30, %c0_31, %c0_32] : memref<1x8x128xf32, #tpu.memory_space<vmem>>, vector<1x8x128xf32>
    %52 = vector.shape_cast %51 : vector<1x8x128xf32> to vector<8x128xf32>
    %53 = vector.shape_cast %50 : vector<8x128xf32> to vector<1x8x128xf32>
    tpu.vector_store %arg6[%c0_30, %c0_31, %c0_32], %53 {strides = array<i32>} : memref<1x8x128xf32, #tpu.memory_space<vmem>>, vector<1x8x128xf32>,
    return
  }
  func.func @transform_0(%arg0: i32) -> (i32, i32, i32) {
    %c0_i32 = arith.constant 0 : i32
    %c0_i32_0 = arith.constant 0 : i32
    %c0_i32_1 = arith.constant 0 : i32
    return %arg0, %c0_i32, %c0_i32_0 : i32, i32, i32
  }
  func.func @transform_1(%arg0: i32) -> (i32, i32, i32) {
    %c0_i32 = arith.constant 0 : i32
    %c0_i32_0 = arith.constant 0 : i32
    %c0_i32_1 = arith.constant 0 : i32
    %c0_i32_2 = arith.constant 0 : i32
    return %c0_i32, %c0_i32_0, %c0_i32_1 : i32, i32, i32
  }
  func.func @transform_2(%arg0: i32) -> (i32, i32) {
    %c0_i32 = arith.constant 0 : i32
    %c0_i32_0 = arith.constant 0 : i32
    %c0_i32_1 = arith.constant 0 : i32
    return %c0_i32, %c0_i32_0 : i32, i32
  }
  func.func @transform_3(%arg0: i32) -> (i32, i32, i32) {
    %c0_i32 = arith.constant 0 : i32
    %c0_i32_0 = arith.constant 0 : i32
    %c0_i32_1 = arith.constant 0 : i32
    %c0_i32_2 = arith.constant 0 : i32
    return %c0_i32, %c0_i32_0, %c0_i32_1 : i32, i32, i32
  }
  func.func @transform_4(%arg0: i32) -> (i32, i32) {
    %c0_i32 = arith.constant 0 : i32
    %c0_i32_0 = arith.constant 0 : i32
    %c0_i32_1 = arith.constant 0 : i32
    return %c0_i32, %c0_i32_0 : i32, i32
  }
  func.func @transform_5(%arg0: i32) -> (i32, i32, i32) {
    %c0_i32 = arith.constant 0 : i32
    %c0_i32_0 = arith.constant 0 : i32
    %c0_i32_1 = arith.constant 0 : i32
    return %arg0, %c0_i32, %c0_i32_0 : i32, i32, i32
  }
}

</mosaic_0001>

<llo_original>
// kernel: tpu_custom_call.1
$region0: #{tpu_custom_call.1}
  #allocation0 [shape = 'u32[]', space=smem, size = 0x4, offset = 0x4, fixed_abs, tag = 'smem constant byte address 0x4 - core index']
  #allocation1 [shape = 'u32[144,128]{1,0:T(1,128)}', space=vmem, size = 0x12000, scoped, tag = 'internal scratch']
  %s0 = inlined_call_operand.hbm [shape: f32[2,8,128], index: 0, kind: input, shape index: {}]
  %s1 = inlined_call_operand.hbm [shape: bf16[3,128,128], index: 1, kind: input, shape index: {}]
  %s2 = inlined_call_operand.vmem [shape: f32[1,128], index: 2, kind: input, shape index: {}]
  %s3 = inlined_call_operand.hbm [shape: bf16[3,128,128], index: 3, kind: input, shape index: {}]
  %s4 = inlined_call_operand.vmem [shape: f32[1,128], index: 4, kind: input, shape index: {}]
  %s5 = inlined_call_operand.hbm [shape: f32[2,8,128], index: 5, kind: output, shape index: {}]
  %s6 = sld [smem:[#allocation0]]
  $region65: #{tpu_custom_call.1} parent=0
    _
  %s8 = ssub.s32 1, %s6
  %s9 = scalar_select 0, %s8, %s6
  $region1: #{tpu_custom_call.1} parent=0
    #allocation2 [shape = 'u8[8192]{0}', space=vmem, size = 0x2000, scoped, tag = 'input window, operand 0']
    #allocation3 [shape = 's32[2]{0}', space=sflag, size = 0x8, scoped, tag = 'scoped memory for tpu_custom_call.1']
    #allocation4 [shape = 's32[2]{0}', space=sflag, size = 0x8, scoped, tag = 'scoped memory for tpu_custom_call.1']
    #allocation5 [shape = 'u8[98304]{0}', space=vmem, size = 0x18000, scoped, tag = 'input window, operand 1, single buffered']
    #allocation6 [shape = 's32[1]{0}', space=sflag, size = 0x4, scoped, tag = 'scoped memory for tpu_custom_call.1']
    #allocation7 [shape = 'u8[98304]{0}', space=vmem, size = 0x18000, scoped, tag = 'input window, operand 3, single buffered']
    #allocation8 [shape = 'u8[8192]{0}', space=vmem, size = 0x2000, scoped, tag = 'output window, operand 0']
    %10 = vsyncpa [#allocation3], 0
    %s11 = scalar_lea.sflag [#allocation3], 1
    %12 = vsyncpa %s11, 0
    %13 = vsyncpa [#allocation6], 0
    %14 = vsyncpa [#allocation4], 0
    %s15 = scalar_lea.sflag [#allocation4], 1
    %16 = vsyncpa %s15, 0
    loop: start=0, step=1, limit=4
    $region2: #{tpu_custom_call.1} parent=1 // loop_pre_header
      _
    $region3: #{tpu_custom_call.1} parent=1 // loop_header
      %s18 = sphi 0, %s22
      %p19 = scmp.ge.s32.totalorder %s18, 4
      %s28 = sphi 0, %s30
      %s31 = sphi 0, %s28
      %s32 = sphi 0, %s31
      %s48 = sphi 0, %s32
      %s52 = sphi 0, %s52
      %s54 = sphi 0, %s52
      %s55 = sphi 0, %s54
      %s69 = sphi 0, %s55
      %s73 = sphi 0, %s73
      %s75 = sphi 0, %s73
      %s76 = sphi 0, %s75
      %s90 = sphi 0, %s76
      %s94 = sphi 0, %s94
      %s96 = sphi 0, %s94
      %s97 = sphi 0, %s96
      %s111 = sphi 0, %s97
      %s115 = sphi 0, %s115
      %s117 = sphi 0, %s115
      %s118 = sphi 0, %s117
      %s132 = sphi 0, %s118
      %s138 = sphi 0, %s140
      %s141 = sphi 0, %s138
      %s142 = sphi 0, %s141
      %s158 = sphi 0, %s142
    $region4: #{tpu_custom_call.1} parent=1 // loop_header_branch
      %21 = sbr.rel (%p19) target = $region8
    $region5: #{tpu_custom_call.1} parent=1 // loop_body
      %s23 = ssub.s32 %s18, 1
      %s24 = ssub.s32 %s18, 2
      %s25 = sadd.s32 %s18, 1
      %s26 = ssub.s32 %s18, %s25
      %p27 = scmp.eq.s32.totalorder %s26, 0
      %s29 = sadd.s32 %s28, 1
      %s30 = scalar_select %p27, %s28, %s29
      %p33 = pneg %p27
      %p34 = scmp.eq.s32.totalorder %s18, 1
      %p35 = por %p33, %p34
      %p36 = scmp.ne.s32.totalorder %s28, %s31
      %p37 = scmp.eq.s32.totalorder %s18, 0
      %p38 = por %p36, %p37
      %p39 = scmp.ne.s32.totalorder %s28, %s31
      %p40 = scmp.eq.s32.totalorder %s23, 1
      %p41 = por %p39, %p40
      %p42 = scmp.ne.s32.totalorder %s31, %s32
      %p43 = scmp.eq.s32.totalorder %s23, 0
      %p44 = por %p42, %p43
      %p45 = scmp.ne.s32.totalorder %s31, %s32
      %p46 = scmp.eq.s32.totalorder %s24, 1
      %p47 = por %p45, %p46
      %p49 = scmp.ne.s32.totalorder %s32, %s48
      %p50 = scmp.eq.s32.totalorder %s24, 0
      %p51 = por %p49, %p50
      %s53 = sadd.s32 %s52, 1
      %p56 = scmp.eq.s32.totalorder %s18, 1
      %p57 = scmp.ne.s32.totalorder %s52, %s54
      %p58 = scmp.eq.s32.totalorder %s18, 0
      %p59 = por %p57, %p58
      %p60 = scmp.ne.s32.totalorder %s52, %s54
      %p61 = scmp.eq.s32.totalorder %s23, 1
      %p62 = por %p60, %p61
      %p63 = scmp.ne.s32.totalorder %s54, %s55
      %p64 = scmp.eq.s32.totalorder %s23, 0
      %p65 = por %p63, %p64
      %p66 = scmp.ne.s32.totalorder %s54, %s55
      %p67 = scmp.eq.s32.totalorder %s24, 1
      %p68 = por %p66, %p67
      %p70 = scmp.ne.s32.totalorder %s55, %s69
      %p71 = scmp.eq.s32.totalorder %s24, 0
      %p72 = por %p70, %p71
      %s74 = sadd.s32 %s73, 1
      %p77 = scmp.eq.s32.totalorder %s18, 1
      %p78 = scmp.ne.s32.totalorder %s73, %s75
      %p79 = scmp.eq.s32.totalorder %s18, 0
      %p80 = por %p78, %p79
      %p81 = scmp.ne.s32.totalorder %s73, %s75
      %p82 = scmp.eq.s32.totalorder %s23, 1
      %p83 = por %p81, %p82
      %p84 = scmp.ne.s32.totalorder %s75, %s76
      %p85 = scmp.eq.s32.totalorder %s23, 0
      %p86 = por %p84, %p85
      %p87 = scmp.ne.s32.totalorder %s75, %s76
      %p88 = scmp.eq.s32.totalorder %s24, 1
      %p89 = por %p87, %p88
      %p91 = scmp.ne.s32.totalorder %s76, %s90
      %p92 = scmp.eq.s32.totalorder %s24, 0
      %p93 = por %p91, %p92
      %s95 = sadd.s32 %s94, 1
      %p98 = scmp.eq.s32.totalorder %s18, 1
      %p99 = scmp.ne.s32.totalorder %s94, %s96
      %p100 = scmp.eq.s32.totalorder %s18, 0
      %p101 = por %p99, %p100
      %p102 = scmp.ne.s32.totalorder %s94, %s96
      %p103 = scmp.eq.s32.totalorder %s23, 1
      %p104 = por %p102, %p103
      %p105 = scmp.ne.s32.totalorder %s96, %s97
      %p106 = scmp.eq.s32.totalorder %s23, 0
      %p107 = por %p105, %p106
      %p108 = scmp.ne.s32.totalorder %s96, %s97
      %p109 = scmp.eq.s32.totalorder %s24, 1
      %p110 = por %p108, %p109
      %p112 = scmp.ne.s32.totalorder %s97, %s111
      %p113 = scmp.eq.s32.totalorder %s24, 0
      %p114 = por %p112, %p113
      %s116 = sadd.s32 %s115, 1
      %p119 = scmp.eq.s32.totalorder %s18, 1
      %p120 = scmp.ne.s32.totalorder %s115, %s117
      %p121 = scmp.eq.s32.totalorder %s18, 0
      %p122 = por %p120, %p121
      %p123 = scmp.ne.s32.totalorder %s115, %s117
      %p124 = scmp.eq.s32.totalorder %s23, 1
      %p125 = por %p123, %p124
      %p126 = scmp.ne.s32.totalorder %s117, %s118
      %p127 = scmp.eq.s32.totalorder %s23, 0
      %p128 = por %p126, %p127
      %p129 = scmp.ne.s32.totalorder %s117, %s118
      %p130 = scmp.eq.s32.totalorder %s24, 1
      %p131 = por %p129, %p130
      %p133 = scmp.ne.s32.totalorder %s118, %s132
      %p134 = scmp.eq.s32.totalorder %s24, 0
      %p135 = por %p133, %p134
      %s136 = ssub.s32 %s18, %s25
      %p137 = scmp.eq.s32.totalorder %s136, 0
      %s139 = sadd.s32 %s138, 1
      %s140 = scalar_select %p137, %s138, %s139
      %p143 = pneg %p137
      %p144 = scmp.eq.s32.totalorder %s18, 1
      %p145 = por %p143, %p144
      %p146 = scmp.ne.s32.totalorder %s138, %s141
      %p147 = scmp.eq.s32.totalorder %s18, 0
      %p148 = por %p146, %p147
      %p149 = scmp.ne.s32.totalorder %s138, %s141
      %p150 = scmp.eq.s32.totalorder %s23, 1
      %p151 = por %p149, %p150
      %p152 = scmp.ne.s32.totalorder %s141, %s142
      %p153 = scmp.eq.s32.totalorder %s23, 0
      %p154 = por %p152, %p153
      %p155 = scmp.ne.s32.totalorder %s141, %s142
      %p156 = scmp.eq.s32.totalorder %s24, 1
      %p157 = por %p155, %p156
      %p159 = scmp.ne.s32.totalorder %s142, %s158
      %p160 = scmp.eq.s32.totalorder %s24, 0
      %p161 = por %p159, %p160
      %p162 = scmp.le.s32.totalorder 1, %s18
      %p163 = scmp.lt.s32.totalorder %s18, 3
      %p164 = pnand %p162, %p163
      %p165 = pneg %p164
      // Predicated region
      $region9: #{tpu_custom_call.1} parent=5 // pred_check
        _
      $region10: #{tpu_custom_call.1} parent=5 // pred_check_branch
        %167 = sbr.rel (%p164) target = $region12
      $region11: #{tpu_custom_call.1} parent=5 // pred_region
        %s168 = ssub.s32 %s18, 1
        // Predicated region
        $region13: #{tpu_custom_call.1} parent=11 // pred_check
          %p169 = pneg %p65
        $region14: #{tpu_custom_call.1} parent=11 // pred_check_branch
          %171 = sbr.rel (%p169) target = $region16
        $region15: #{tpu_custom_call.1} parent=11 // pred_region
          %s173 = ssub.s32 3072, 3072
          %174 = vsyncadd [#allocation6], %s173
          %s175 = sshll.u32 [#allocation5], 4
          %s176 = int_to_ptr.vmem [resolvable:$true] %s175
          %181 = dma.hbm_to_vmem [thread:$0]  %s1, 3072, %s176, [#allocation6], 64, 64, 4
        $region16: #{tpu_custom_call.1} parent=11 // pred_fallthru
          _
        // Predicated region
        $region17: #{tpu_custom_call.1} parent=11 // pred_check
          %p182 = pneg %p86
        $region18: #{tpu_custom_call.1} parent=11 // pred_check_branch
          %184 = sbr.rel (%p182) target = $region20
        $region19: #{tpu_custom_call.1} parent=11 // pred_region
          _
        $region20: #{tpu_custom_call.1} parent=11 // pred_fallthru
          _
        // Predicated region
        $region21: #{tpu_custom_call.1} parent=11 // pred_check
          %p185 = pneg %p107
        $region22: #{tpu_custom_call.1} parent=11 // pred_check_branch
          %187 = sbr.rel (%p185) target = $region24
        $region23: #{tpu_custom_call.1} parent=11 // pred_region
          %s189 = ssub.s32 3072, 3072
          %190 = vsyncadd [#allocation6], %s189
          %s191 = sshll.u32 [#allocation7], 4
          %s192 = int_to_ptr.vmem [resolvable:$true] %s191
          %197 = dma.hbm_to_vmem [thread:$0]  %s3, 3072, %s192, [#allocation6], 64, 64, 4
        $region24: #{tpu_custom_call.1} parent=11 // pred_fallthru
          _
        // Predicated region
        $region25: #{tpu_custom_call.1} parent=11 // pred_check
          %p198 = pneg %p128
        $region26: #{tpu_custom_call.1} parent=11 // pred_check_branch
          %200 = sbr.rel (%p198) target = $region28
        $region27: #{tpu_custom_call.1} parent=11 // pred_region
          _
        $region28: #{tpu_custom_call.1} parent=11 // pred_fallthru
          _
      $region12: #{tpu_custom_call.1} parent=5 // pred_fallthru
        _
      %p201 = scmp.lt.s32.totalorder %s18, 2
      // Predicated region
      $region29: #{tpu_custom_call.1} parent=5 // pred_check
        %p202 = pneg %p201
      $region30: #{tpu_custom_call.1} parent=5 // pred_check_branch
        %204 = sbr.rel (%p202) target = $region32
      $region31: #{tpu_custom_call.1} parent=5 // pred_region
        // Predicated region
        $region33: #{tpu_custom_call.1} parent=31 // pred_check
          %p205 = pneg %p38
        $region34: #{tpu_custom_call.1} parent=31 // pred_check_branch
          %207 = sbr.rel (%p205) target = $region36
        $region35: #{tpu_custom_call.1} parent=31 // pred_region
          %s208 = sand.u32 %s28, 1
          %s209 = scalar_lea.sflag [#allocation3], %s208
          %s210 = sand.u32 %s28, 1
          %s211 = smul.addr %s210, 8
          %s212 = scalar_lea.vmem [#allocation2], %s211
          %s214 = ssub.s32 128, 128
          %215 = vsyncadd %s209, %s214
          %s216 = smul.addr %s18, 128
          %s217 = scalar_lea.hbm %s0, %s216
          %s219 = sshll.u32 %s212, 4
          %s220 = int_to_ptr.vmem [resolvable:$true] %s219
          %222 = dma.hbm_to_vmem [thread:$0]  %s217, 128, %s220, %s209
        $region36: #{tpu_custom_call.1} parent=31 // pred_fallthru
          _
      $region32: #{tpu_custom_call.1} parent=5 // pred_fallthru
        _
      %p223 = scmp.le.s32.totalorder 1, %s18
      %p224 = scmp.lt.s32.totalorder %s18, 3
      %p225 = pnand %p223, %p224
      %p226 = pneg %p225
      // Predicated region
      $region37: #{tpu_custom_call.1} parent=5 // pred_check
        _
      $region38: #{tpu_custom_call.1} parent=5 // pred_check_branch
        %228 = sbr.rel (%p225) target = $region40
      $region39: #{tpu_custom_call.1} parent=5 // pred_region
        %s229 = ssub.s32 %s18, 1
        %s230 = sand.u32 %s31, 1
        %s231 = scalar_lea.sflag [#allocation3], %s230
        %s232 = sand.u32 %s31, 1
        %s233 = smul.addr %s232, 8
        %s234 = scalar_lea.vmem [#allocation2], %s233
        // Predicated region
        $region41: #{tpu_custom_call.1} parent=39 // pred_check
          %p235 = pneg %p44
        $region42: #{tpu_custom_call.1} parent=39 // pred_check_branch
          %237 = sbr.rel (%p235) target = $region44
        $region43: #{tpu_custom_call.1} parent=39 // pred_region
          %238 = dma.done %s231, 128
        $region44: #{tpu_custom_call.1} parent=39 // pred_fallthru
          _
        // Predicated region
        $region45: #{tpu_custom_call.1} parent=39 // pred_check
          %p239 = pneg %p65
        $region46: #{tpu_custom_call.1} parent=39 // pred_check_branch
          %241 = sbr.rel (%p239) target = $region48
        $region47: #{tpu_custom_call.1} parent=39 // pred_region
          %242 = dma.done [#allocation6], 3072
        $region48: #{tpu_custom_call.1} parent=39 // pred_fallthru
          _
        // Predicated region
        $region49: #{tpu_custom_call.1} parent=39 // pred_check
          %p243 = pneg %p107
        $region50: #{tpu_custom_call.1} parent=39 // pred_check_branch
          %245 = sbr.rel (%p243) target = $region52
        $region51: #{tpu_custom_call.1} parent=39 // pred_region
          %246 = dma.done [#allocation6], 3072
        $region52: #{tpu_custom_call.1} parent=39 // pred_fallthru
          _
        %s247 = sand.u32 %s31, 1
        %s248 = scalar_lea.sflag [#allocation3], %s247
        %s249 = sand.u32 %s31, 1
        %s250 = smul.addr %s249, 8
        %s251 = scalar_lea.vmem [#allocation2], %s250
        %p252 = pneg %p44
        %p253 = pneg %p41
        %p254 = pneg %p65
        %p255 = pneg %p62
        %p256 = pneg %p86
        %p257 = pneg %p83
        %p258 = pneg %p107
        %p259 = pneg %p104
        %p260 = pneg %p128
        %p261 = pneg %p125
        %p262 = pneg %p154
        %p263 = pneg %p151
        %s264 = sand.u32 %s141, 1
        %s265 = scalar_lea.sflag [#allocation4], %s264
        %s266 = sand.u32 %s141, 1
        %s267 = smul.addr %s266, 8
        %s268 = scalar_lea.vmem [#allocation8], %s267
        %v270 = vld [vmem:[%s234] sm:$0xff]
        %v272 = vrot.slane %v270, 7
        %v274 = vrot.slane %v270, 6
        %vm276 = vcmask 1040384
        %v277 = vsel %vm276, %v270, %v272
        %v278 = vsel %vm276, %v272, %v274
        %v279 = vpack.c.bf16 %v278, %v277
        %v280 = vld [vmem:[#allocation5] sm:$0xf]
        %v281 = vld [vmem:[#allocation5 + $0x4] sm:$0xf]
        %v282 = vld [vmem:[#allocation5 + $0x8] sm:$0xf]
        %v283 = vld [vmem:[#allocation5 + $0xc] sm:$0xf]
        %v284 = vld [vmem:[#allocation5 + $0x10] sm:$0xf]
        %v285 = vld [vmem:[#allocation5 + $0x14] sm:$0xf]
        %v286 = vld [vmem:[#allocation5 + $0x18] sm:$0xf]
        %v287 = vld [vmem:[#allocation5 + $0x1c] sm:$0xf]
        %v288 = vld [vmem:[#allocation5 + $0x20] sm:$0xf]
        %v289 = vld [vmem:[#allocation5 + $0x24] sm:$0xf]
        %v290 = vld [vmem:[#allocation5 + $0x28] sm:$0xf]
        %v291 = vld [vmem:[#allocation5 + $0x2c] sm:$0xf]
        %v292 = vld [vmem:[#allocation5 + $0x30] sm:$0xf]
        %v293 = vld [vmem:[#allocation5 + $0x34] sm:$0xf]
        %v294 = vld [vmem:[#allocation5 + $0x38] sm:$0xf]
        %v295 = vld [vmem:[#allocation5 + $0x3c] sm:$0xf]
        %s296 = scalar_lea.vmem [#allocation5], 64
        %v297 = vld [vmem:[%s296] sm:$0xf]
        %v298 = vld [vmem:[%s296 + $0x4] sm:$0xf]
        %v299 = vld [vmem:[%s296 + $0x8] sm:$0xf]
        %v300 = vld [vmem:[%s296 + $0xc] sm:$0xf]
        %v301 = vld [vmem:[%s296 + $0x10] sm:$0xf]
        %v302 = vld [vmem:[%s296 + $0x14] sm:$0xf]
        %v303 = vld [vmem:[%s296 + $0x18] sm:$0xf]
        %v304 = vld [vmem:[%s296 + $0x1c] sm:$0xf]
        %v305 = vld [vmem:[%s296 + $0x20] sm:$0xf]
        %v306 = vld [vmem:[%s296 + $0x24] sm:$0xf]
        %v307 = vld [vmem:[%s296 + $0x28] sm:$0xf]
        %v308 = vld [vmem:[%s296 + $0x2c] sm:$0xf]
        %v309 = vld [vmem:[%s296 + $0x30] sm:$0xf]
        %v310 = vld [vmem:[%s296 + $0x34] sm:$0xf]
        %v311 = vld [vmem:[%s296 + $0x38] sm:$0xf]
        %v312 = vld [vmem:[%s296 + $0x3c] sm:$0xf]
        %v314 = vshrl.u32 %v279, 16
        %v316 = vshll.u32 %v279, 16
        %v318 = vrot.slane %v316, 1
        %v319 = vor.u32 %v314, %v318
        %v337 = vunpack.c.l.b16 %v297
        %v338 = vunpack.c.l.b16 %v298
        %v339 = vunpack.c.l.b16 %v299
        %v340 = vunpack.c.l.b16 %v300
        %v341 = vunpack.c.l.b16 %v301
        %v342 = vunpack.c.l.b16 %v302
        %v343 = vunpack.c.l.b16 %v303
        %v344 = vunpack.c.l.b16 %v304
        %v345 = vunpack.c.l.b16 %v305
        %v346 = vunpack.c.l.b16 %v306
        %v347 = vunpack.c.l.b16 %v307
        %v348 = vunpack.c.l.b16 %v308
        %v349 = vunpack.c.l.b16 %v309
        %v350 = vunpack.c.l.b16 %v310
        %v351 = vunpack.c.l.b16 %v311
        %v352 = vunpack.c.l.b16 %v312
        %v353 = vpack.c.b16 %v338, %v337
        %v354 = vpack.c.b16 %v340, %v339
        %v355 = vpack.c.b16 %v342, %v341
        %v356 = vpack.c.b16 %v344, %v343
        %v357 = vpack.c.b16 %v346, %v345
        %v358 = vpack.c.b16 %v348, %v347
        %v359 = vpack.c.b16 %v350, %v349
        %v360 = vpack.c.b16 %v352, %v351
        %369 = vmatprep.subr.bf16.mxu0 0
        %370 = vmatpush1.bf16.msra.mxu0 %v353
        %371 = vmatprep.subr.bf16.mxu0 0
        %372 = vmatpush1.bf16.msra.mxu0 %v354
        %373 = vmatprep.subr.bf16.mxu0 0
        %374 = vmatpush1.bf16.msra.mxu0 %v355
        %375 = vmatprep.subr.bf16.mxu0 0
        %376 = vmatpush1.bf16.msra.mxu0 %v356
        %377 = vmatprep.subr.bf16.mxu0 0
        %378 = vmatpush1.bf16.msra.mxu0 %v357
        %379 = vmatprep.subr.bf16.mxu0 0
        %380 = vmatpush1.bf16.msra.mxu0 %v358
        %381 = vmatprep.subr.bf16.mxu0 0
        %382 = vmatpush1.bf16.msra.mxu0 %v359
        %383 = vmatprep.subr.bf16.mxu0 0
        %384 = vmatpush1.bf16.msra.mxu0 %v360
        %385 = vmatprep.subr.bf16.mxu0 0
        %386 = vmatpush1.bf16.msra.mxu0 0
        %387 = vmatprep.subr.bf16.mxu0 0
        %388 = vmatpush1.bf16.msra.mxu0 0
        %389 = vmatprep.subr.bf16.mxu0 0
        %390 = vmatpush1.bf16.msra.mxu0 0
        %391 = vmatprep.subr.bf16.mxu0 0
        %392 = vmatpush1.bf16.msra.mxu0 0
        %393 = vmatprep.subr.bf16.mxu0 0
        %394 = vmatpush1.bf16.msra.mxu0 0
        %395 = vmatprep.subr.bf16.mxu0 0
        %396 = vmatpush1.bf16.msra.mxu0 0
        %397 = vmatprep.subr.bf16.mxu0 0
        %398 = vmatpush1.bf16.msra.mxu0 0
        %399 = vmatprep.subr.bf16.mxu0 0
        %400 = vmatpush1.bf16.msra.mxu0 0
        %401 = vmatprep.mubr.bf16.mxu0 0
        %402 = vmatmul.mubr.bf16.gmra.mrb[0].mxu0 %v319
        %v403 = vpop.f32.mrb[0].mxu0
        %v404 = vadd.f32 0.0, %v403
        %v405 = vpop.f32.mrb[0].mxu0
        %v406 = vpop.f32.mrb[0].mxu0
        %v407 = vpop.f32.mrb[0].mxu0
        %408 = vdwg.mxu0
        %v425 = vunpack.c.l.b16 %v280
        %v426 = vunpack.c.l.b16 %v281
        %v427 = vunpack.c.l.b16 %v282
        %v428 = vunpack.c.l.b16 %v283
        %v429 = vunpack.c.l.b16 %v284
        %v430 = vunpack.c.l.b16 %v285
        %v431 = vunpack.c.l.b16 %v286
        %v432 = vunpack.c.l.b16 %v287
        %v433 = vunpack.c.l.b16 %v288
        %v434 = vunpack.c.l.b16 %v289
        %v435 = vunpack.c.l.b16 %v290
        %v436 = vunpack.c.l.b16 %v291
        %v437 = vunpack.c.l.b16 %v292
        %v438 = vunpack.c.l.b16 %v293
        %v439 = vunpack.c.l.b16 %v294
        %v440 = vunpack.c.l.b16 %v295
        %v441 = vpack.c.b16 %v426, %v425
        %v442 = vpack.c.b16 %v428, %v427
        %v443 = vpack.c.b16 %v430, %v429
        %v444 = vpack.c.b16 %v432, %v431
        %v445 = vpack.c.b16 %v434, %v433
        %v446 = vpack.c.b16 %v436, %v435
        %v447 = vpack.c.b16 %v438, %v437
        %v448 = vpack.c.b16 %v440, %v439
        %457 = vmatprep.subr.bf16.mxu0 0
        %458 = vmatpush1.bf16.msra.mxu0 %v441
        %459 = vmatprep.subr.bf16.mxu0 0
        %460 = vmatpush1.bf16.msra.mxu0 %v442
        %461 = vmatprep.subr.bf16.mxu0 0
        %462 = vmatpush1.bf16.msra.mxu0 %v443
        %463 = vmatprep.subr.bf16.mxu0 0
        %464 = vmatpush1.bf16.msra.mxu0 %v444
        %465 = vmatprep.subr.bf16.mxu0 0
        %466 = vmatpush1.bf16.msra.mxu0 %v445
        %467 = vmatprep.subr.bf16.mxu0 0
        %468 = vmatpush1.bf16.msra.mxu0 %v446
        %469 = vmatprep.subr.bf16.mxu0 0
        %470 = vmatpush1.bf16.msra.mxu0 %v447
        %471 = vmatprep.subr.bf16.mxu0 0
        %472 = vmatpush1.bf16.msra.mxu0 %v448
        %473 = vmatprep.subr.bf16.mxu0 0
        %474 = vmatpush1.bf16.msra.mxu0 0
        %475 = vmatprep.subr.bf16.mxu0 0
        %476 = vmatpush1.bf16.msra.mxu0 0
        %477 = vmatprep.subr.bf16.mxu0 0
        %478 = vmatpush1.bf16.msra.mxu0 0
        %479 = vmatprep.subr.bf16.mxu0 0
        %480 = vmatpush1.bf16.msra.mxu0 0
        %481 = vmatprep.subr.bf16.mxu0 0
        %482 = vmatpush1.bf16.msra.mxu0 0
        %483 = vmatprep.subr.bf16.mxu0 0
        %484 = vmatpush1.bf16.msra.mxu0 0
        %485 = vmatprep.subr.bf16.mxu0 0
        %486 = vmatpush1.bf16.msra.mxu0 0
        %487 = vmatprep.subr.bf16.mxu0 0
        %488 = vmatpush1.bf16.msra.mxu0 0
        %489 = vmatprep.mubr.bf16.mxu0 0
        %490 = vmatmul.mubr.bf16.gmra.mrb[0].mxu0 %v279
        %v491 = vpop.f32.mrb[0].mxu0
        %v492 = vadd.f32 %v404, %v491
        %v493 = vpop.f32.mrb[0].mxu0
        %v494 = vpop.f32.mrb[0].mxu0
        %v495 = vpop.f32.mrb[0].mxu0
        %496 = vdwg.mxu0
        %s497 = scalar_lea.vmem [#allocation5], 128
        %v498 = vld [vmem:[%s497] sm:$0xf]
        %v499 = vld [vmem:[%s497 + $0x4] sm:$0xf]
        %v500 = vld [vmem:[%s497 + $0x8] sm:$0xf]
        %v501 = vld [vmem:[%s497 + $0xc] sm:$0xf]
        %v502 = vld [vmem:[%s497 + $0x10] sm:$0xf]
        %v503 = vld [vmem:[%s497 + $0x14] sm:$0xf]
        %v504 = vld [vmem:[%s497 + $0x18] sm:$0xf]
        %v505 = vld [vmem:[%s497 + $0x1c] sm:$0xf]
        %v506 = vld [vmem:[%s497 + $0x20] sm:$0xf]
        %v507 = vld [vmem:[%s497 + $0x24] sm:$0xf]
        %v508 = vld [vmem:[%s497 + $0x28] sm:$0xf]
        %v509 = vld [vmem:[%s497 + $0x2c] sm:$0xf]
        %v510 = vld [vmem:[%s497 + $0x30] sm:$0xf]
        %v511 = vld [vmem:[%s497 + $0x34] sm:$0xf]
        %v512 = vld [vmem:[%s497 + $0x38] sm:$0xf]
        %v513 = vld [vmem:[%s497 + $0x3c] sm:$0xf]
        %v515 = vrot.slane %v279, 1
        %v533 = vunpack.c.l.b16 %v498
        %v534 = vunpack.c.l.b16 %v499
        %v535 = vunpack.c.l.b16 %v500
        %v536 = vunpack.c.l.b16 %v501
        %v537 = vunpack.c.l.b16 %v502
        %v538 = vunpack.c.l.b16 %v503
        %v539 = vunpack.c.l.b16 %v504
        %v540 = vunpack.c.l.b16 %v505
        %v541 = vunpack.c.l.b16 %v506
        %v542 = vunpack.c.l.b16 %v507
        %v543 = vunpack.c.l.b16 %v508
        %v544 = vunpack.c.l.b16 %v509
        %v545 = vunpack.c.l.b16 %v510
        %v546 = vunpack.c.l.b16 %v511
        %v547 = vunpack.c.l.b16 %v512
        %v548 = vunpack.c.l.b16 %v513
        %v549 = vpack.c.b16 %v534, %v533
        %v550 = vpack.c.b16 %v536, %v535
        %v551 = vpack.c.b16 %v538, %v537
        %v552 = vpack.c.b16 %v540, %v539
        %v553 = vpack.c.b16 %v542, %v541
        %v554 = vpack.c.b16 %v544, %v543
        %v555 = vpack.c.b16 %v546, %v545
        %v556 = vpack.c.b16 %v548, %v547
        %565 = vmatprep.subr.bf16.mxu0 0
        %566 = vmatpush1.bf16.msra.mxu0 %v549
        %567 = vmatprep.subr.bf16.mxu0 0
        %568 = vmatpush1.bf16.msra.mxu0 %v550
        %569 = vmatprep.subr.bf16.mxu0 0
        %570 = vmatpush1.bf16.msra.mxu0 %v551
        %571 = vmatprep.subr.bf16.mxu0 0
        %572 = vmatpush1.bf16.msra.mxu0 %v552
        %573 = vmatprep.subr.bf16.mxu0 0
        %574 = vmatpush1.bf16.msra.mxu0 %v553
        %575 = vmatprep.subr.bf16.mxu0 0
        %576 = vmatpush1.bf16.msra.mxu0 %v554
        %577 = vmatprep.subr.bf16.mxu0 0
        %578 = vmatpush1.bf16.msra.mxu0 %v555
        %579 = vmatprep.subr.bf16.mxu0 0
        %580 = vmatpush1.bf16.msra.mxu0 %v556
        %581 = vmatprep.subr.bf16.mxu0 0
        %582 = vmatpush1.bf16.msra.mxu0 0
        %583 = vmatprep.subr.bf16.mxu0 0
        %584 = vmatpush1.bf16.msra.mxu0 0
        %585 = vmatprep.subr.bf16.mxu0 0
        %586 = vmatpush1.bf16.msra.mxu0 0
        %587 = vmatprep.subr.bf16.mxu0 0
        %588 = vmatpush1.bf16.msra.mxu0 0
        %589 = vmatprep.subr.bf16.mxu0 0
        %590 = vmatpush1.bf16.msra.mxu0 0
        %591 = vmatprep.subr.bf16.mxu0 0
        %592 = vmatpush1.bf16.msra.mxu0 0
        %593 = vmatprep.subr.bf16.mxu0 0
        %594 = vmatpush1.bf16.msra.mxu0 0
        %595 = vmatprep.subr.bf16.mxu0 0
        %596 = vmatpush1.bf16.msra.mxu0 0
        %597 = vmatprep.mubr.bf16.mxu0 0
        %598 = vmatmul.mubr.bf16.gmra.mrb[0].mxu0 %v515
        %v599 = vpop.f32.mrb[0].mxu0
        %v600 = vadd.f32 0.0, %v599
        %v601 = vpop.f32.mrb[0].mxu0
        %v602 = vpop.f32.mrb[0].mxu0
        %v603 = vpop.f32.mrb[0].mxu0
        %604 = vdwg.mxu0
        %v605 = vadd.f32 %v492, %v600
        %v606 = vld [vmem:[%s2] sm:$0x1]
        %v608 = vlaneseq
        %v609 = vshrl.u32 %v608, 7
        %v610 = vsub.s32 0, %v609
        %v611 = vrot.slane %v606, %v610
        %v613 = vadd.f32 %v605, %v611
        %v614 = vmax.f32 %v613, 0.0
        %v616 = vrot.slane %v614, 7
        %v618 = vrot.slane %v614, 6
        %v620 = vsel %vm276, %v614, %v616
        %v621 = vsel %vm276, %v616, %v618
        %v622 = vpack.c.bf16 %v621, %v620
        %v623 = vld [vmem:[#allocation7] sm:$0xf]
        %v624 = vld [vmem:[#allocation7 + $0x4] sm:$0xf]
        %v625 = vld [vmem:[#allocation7 + $0x8] sm:$0xf]
        %v626 = vld [vmem:[#allocation7 + $0xc] sm:$0xf]
        %v627 = vld [vmem:[#allocation7 + $0x10] sm:$0xf]
        %v628 = vld [vmem:[#allocation7 + $0x14] sm:$0xf]
        %v629 = vld [vmem:[#allocation7 + $0x18] sm:$0xf]
        %v630 = vld [vmem:[#allocation7 + $0x1c] sm:$0xf]
        %v631 = vld [vmem:[#allocation7 + $0x20] sm:$0xf]
        %v632 = vld [vmem:[#allocation7 + $0x24] sm:$0xf]
        %v633 = vld [vmem:[#allocation7 + $0x28] sm:$0xf]
        %v634 = vld [vmem:[#allocation7 + $0x2c] sm:$0xf]
        %v635 = vld [vmem:[#allocation7 + $0x30] sm:$0xf]
        %v636 = vld [vmem:[#allocation7 + $0x34] sm:$0xf]
        %v637 = vld [vmem:[#allocation7 + $0x38] sm:$0xf]
        %v638 = vld [vmem:[#allocation7 + $0x3c] sm:$0xf]
        %s639 = scalar_lea.vmem [#allocation7], 64
        %v640 = vld [vmem:[%s639] sm:$0xf]
        %v641 = vld [vmem:[%s639 + $0x4] sm:$0xf]
        %v642 = vld [vmem:[%s639 + $0x8] sm:$0xf]
        %v643 = vld [vmem:[%s639 + $0xc] sm:$0xf]
        %v644 = vld [vmem:[%s639 + $0x10] sm:$0xf]
        %v645 = vld [vmem:[%s639 + $0x14] sm:$0xf]
        %v646 = vld [vmem:[%s639 + $0x18] sm:$0xf]
        %v647 = vld [vmem:[%s639 + $0x1c] sm:$0xf]
        %v648 = vld [vmem:[%s639 + $0x20] sm:$0xf]
        %v649 = vld [vmem:[%s639 + $0x24] sm:$0xf]
        %v650 = vld [vmem:[%s639 + $0x28] sm:$0xf]
        %v651 = vld [vmem:[%s639 + $0x2c] sm:$0xf]
        %v652 = vld [vmem:[%s639 + $0x30] sm:$0xf]
        %v653 = vld [vmem:[%s639 + $0x34] sm:$0xf]
        %v654 = vld [vmem:[%s639 + $0x38] sm:$0xf]
        %v655 = vld [vmem:[%s639 + $0x3c] sm:$0xf]
        %v657 = vshrl.u32 %v622, 16
        %v659 = vshll.u32 %v622, 16
        %v661 = vrot.slane %v659, 1
        %v662 = vor.u32 %v657, %v661
        %v680 = vunpack.c.l.b16 %v640
        %v681 = vunpack.c.l.b16 %v641
        %v682 = vunpack.c.l.b16 %v642
        %v683 = vunpack.c.l.b16 %v643
        %v684 = vunpack.c.l.b16 %v644
        %v685 = vunpack.c.l.b16 %v645
        %v686 = vunpack.c.l.b16 %v646
        %v687 = vunpack.c.l.b16 %v647
        %v688 = vunpack.c.l.b16 %v648
        %v689 = vunpack.c.l.b16 %v649
        %v690 = vunpack.c.l.b16 %v650
        %v691 = vunpack.c.l.b16 %v651
        %v692 = vunpack.c.l.b16 %v652
        %v693 = vunpack.c.l.b16 %v653
        %v694 = vunpack.c.l.b16 %v654
        %v695 = vunpack.c.l.b16 %v655
        %v696 = vpack.c.b16 %v681, %v680
        %v697 = vpack.c.b16 %v683, %v682
        %v698 = vpack.c.b16 %v685, %v684
        %v699 = vpack.c.b16 %v687, %v686
        %v700 = vpack.c.b16 %v689, %v688
        %v701 = vpack.c.b16 %v691, %v690
        %v702 = vpack.c.b16 %v693, %v692
        %v703 = vpack.c.b16 %v695, %v694
        %712 = vmatprep.subr.bf16.mxu0 0
        %713 = vmatpush1.bf16.msra.mxu0 %v696
        %714 = vmatprep.subr.bf16.mxu0 0
        %715 = vmatpush1.bf16.msra.mxu0 %v697
        %716 = vmatprep.subr.bf16.mxu0 0
        %717 = vmatpush1.bf16.msra.mxu0 %v698
        %718 = vmatprep.subr.bf16.mxu0 0
        %719 = vmatpush1.bf16.msra.mxu0 %v699
        %720 = vmatprep.subr.bf16.mxu0 0
        %721 = vmatpush1.bf16.msra.mxu0 %v700
        %722 = vmatprep.subr.bf16.mxu0 0
        %723 = vmatpush1.bf16.msra.mxu0 %v701
        %724 = vmatprep.subr.bf16.mxu0 0
        %725 = vmatpush1.bf16.msra.mxu0 %v702
        %726 = vmatprep.subr.bf16.mxu0 0
        %727 = vmatpush1.bf16.msra.mxu0 %v703
        %728 = vmatprep.subr.bf16.mxu0 0
        %729 = vmatpush1.bf16.msra.mxu0 0
        %730 = vmatprep.subr.bf16.mxu0 0
        %731 = vmatpush1.bf16.msra.mxu0 0
        %732 = vmatprep.subr.bf16.mxu0 0
        %733 = vmatpush1.bf16.msra.mxu0 0
        %734 = vmatprep.subr.bf16.mxu0 0
        %735 = vmatpush1.bf16.msra.mxu0 0
        %736 = vmatprep.subr.bf16.mxu0 0
        %737 = vmatpush1.bf16.msra.mxu0 0
        %738 = vmatprep.subr.bf16.mxu0 0
        %739 = vmatpush1.bf16.msra.mxu0 0
        %740 = vmatprep.subr.bf16.mxu0 0
        %741 = vmatpush1.bf16.msra.mxu0 0
        %742 = vmatprep.subr.bf16.mxu0 0
        %743 = vmatpush1.bf16.msra.mxu0 0
        %744 = vmatprep.mubr.bf16.mxu0 0
        %745 = vmatmul.mubr.bf16.gmra.mrb[0].mxu0 %v662
        %v746 = vpop.f32.mrb[0].mxu0
        %v747 = vadd.f32 0.0, %v746
        %v748 = vpop.f32.mrb[0].mxu0
        %v749 = vpop.f32.mrb[0].mxu0
        %v750 = vpop.f32.mrb[0].mxu0
        %751 = vdwg.mxu0
        %v768 = vunpack.c.l.b16 %v623
        %v769 = vunpack.c.l.b16 %v624
        %v770 = vunpack.c.l.b16 %v625
        %v771 = vunpack.c.l.b16 %v626
        %v772 = vunpack.c.l.b16 %v627
        %v773 = vunpack.c.l.b16 %v628
        %v774 = vunpack.c.l.b16 %v629
        %v775 = vunpack.c.l.b16 %v630
        %v776 = vunpack.c.l.b16 %v631
        %v777 = vunpack.c.l.b16 %v632
        %v778 = vunpack.c.l.b16 %v633
        %v779 = vunpack.c.l.b16 %v634
        %v780 = vunpack.c.l.b16 %v635
        %v781 = vunpack.c.l.b16 %v636
        %v782 = vunpack.c.l.b16 %v637
        %v783 = vunpack.c.l.b16 %v638
        %v784 = vpack.c.b16 %v769, %v768
        %v785 = vpack.c.b16 %v771, %v770
        %v786 = vpack.c.b16 %v773, %v772
        %v787 = vpack.c.b16 %v775, %v774
        %v788 = vpack.c.b16 %v777, %v776
        %v789 = vpack.c.b16 %v779, %v778
        %v790 = vpack.c.b16 %v781, %v780
        %v791 = vpack.c.b16 %v783, %v782
        %800 = vmatprep.subr.bf16.mxu0 0
        %801 = vmatpush1.bf16.msra.mxu0 %v784
        %802 = vmatprep.subr.bf16.mxu0 0
        %803 = vmatpush1.bf16.msra.mxu0 %v785
        %804 = vmatprep.subr.bf16.mxu0 0
        %805 = vmatpush1.bf16.msra.mxu0 %v786
        %806 = vmatprep.subr.bf16.mxu0 0
        %807 = vmatpush1.bf16.msra.mxu0 %v787
        %808 = vmatprep.subr.bf16.mxu0 0
        %809 = vmatpush1.bf16.msra.mxu0 %v788
        %810 = vmatprep.subr.bf16.mxu0 0
        %811 = vmatpush1.bf16.msra.mxu0 %v789
        %812 = vmatprep.subr.bf16.mxu0 0
        %813 = vmatpush1.bf16.msra.mxu0 %v790
        %814 = vmatprep.subr.bf16.mxu0 0
        %815 = vmatpush1.bf16.msra.mxu0 %v791
        %816 = vmatprep.subr.bf16.mxu0 0
        %817 = vmatpush1.bf16.msra.mxu0 0
        %818 = vmatprep.subr.bf16.mxu0 0
        %819 = vmatpush1.bf16.msra.mxu0 0
        %820 = vmatprep.subr.bf16.mxu0 0
        %821 = vmatpush1.bf16.msra.mxu0 0
        %822 = vmatprep.subr.bf16.mxu0 0
        %823 = vmatpush1.bf16.msra.mxu0 0
        %824 = vmatprep.subr.bf16.mxu0 0
        %825 = vmatpush1.bf16.msra.mxu0 0
        %826 = vmatprep.subr.bf16.mxu0 0
        %827 = vmatpush1.bf16.msra.mxu0 0
        %828 = vmatprep.subr.bf16.mxu0 0
        %829 = vmatpush1.bf16.msra.mxu0 0
        %830 = vmatprep.subr.bf16.mxu0 0
        %831 = vmatpush1.bf16.msra.mxu0 0
        %832 = vmatprep.mubr.bf16.mxu0 0
        %833 = vmatmul.mubr.bf16.gmra.mrb[0].mxu0 %v622
        %v834 = vpop.f32.mrb[0].mxu0
        %v835 = vadd.f32 %v747, %v834
        %v836 = vpop.f32.mrb[0].mxu0
        %v837 = vpop.f32.mrb[0].mxu0
        %v838 = vpop.f32.mrb[0].mxu0
        %839 = vdwg.mxu0
        %s840 = scalar_lea.vmem [#allocation7], 128
        %v841 = vld [vmem:[%s840] sm:$0xf]
        %v842 = vld [vmem:[%s840 + $0x4] sm:$0xf]
        %v843 = vld [vmem:[%s840 + $0x8] sm:$0xf]
        %v844 = vld [vmem:[%s840 + $0xc] sm:$0xf]
        %v845 = vld [vmem:[%s840 + $0x10] sm:$0xf]
        %v846 = vld [vmem:[%s840 + $0x14] sm:$0xf]
        %v847 = vld [vmem:[%s840 + $0x18] sm:$0xf]
        %v848 = vld [vmem:[%s840 + $0x1c] sm:$0xf]
        %v849 = vld [vmem:[%s840 + $0x20] sm:$0xf]
        %v850 = vld [vmem:[%s840 + $0x24] sm:$0xf]
        %v851 = vld [vmem:[%s840 + $0x28] sm:$0xf]
        %v852 = vld [vmem:[%s840 + $0x2c] sm:$0xf]
        %v853 = vld [vmem:[%s840 + $0x30] sm:$0xf]
        %v854 = vld [vmem:[%s840 + $0x34] sm:$0xf]
        %v855 = vld [vmem:[%s840 + $0x38] sm:$0xf]
        %v856 = vld [vmem:[%s840 + $0x3c] sm:$0xf]
        %v858 = vrot.slane %v622, 1
        %v876 = vunpack.c.l.b16 %v841
        %v877 = vunpack.c.l.b16 %v842
        %v878 = vunpack.c.l.b16 %v843
        %v879 = vunpack.c.l.b16 %v844
        %v880 = vunpack.c.l.b16 %v845
        %v881 = vunpack.c.l.b16 %v846
        %v882 = vunpack.c.l.b16 %v847
        %v883 = vunpack.c.l.b16 %v848
        %v884 = vunpack.c.l.b16 %v849
        %v885 = vunpack.c.l.b16 %v850
        %v886 = vunpack.c.l.b16 %v851
        %v887 = vunpack.c.l.b16 %v852
        %v888 = vunpack.c.l.b16 %v853
        %v889 = vunpack.c.l.b16 %v854
        %v890 = vunpack.c.l.b16 %v855
        %v891 = vunpack.c.l.b16 %v856
        %v892 = vpack.c.b16 %v877, %v876
        %v893 = vpack.c.b16 %v879, %v878
        %v894 = vpack.c.b16 %v881, %v880
        %v895 = vpack.c.b16 %v883, %v882
        %v896 = vpack.c.b16 %v885, %v884
        %v897 = vpack.c.b16 %v887, %v886
        %v898 = vpack.c.b16 %v889, %v888
        %v899 = vpack.c.b16 %v891, %v890
        %908 = vmatprep.subr.bf16.mxu0 0
        %909 = vmatpush1.bf16.msra.mxu0 %v892
        %910 = vmatprep.subr.bf16.mxu0 0
        %911 = vmatpush1.bf16.msra.mxu0 %v893
        %912 = vmatprep.subr.bf16.mxu0 0
        %913 = vmatpush1.bf16.msra.mxu0 %v894
        %914 = vmatprep.subr.bf16.mxu0 0
        %915 = vmatpush1.bf16.msra.mxu0 %v895
        %916 = vmatprep.subr.bf16.mxu0 0
        %917 = vmatpush1.bf16.msra.mxu0 %v896
        %918 = vmatprep.subr.bf16.mxu0 0
        %919 = vmatpush1.bf16.msra.mxu0 %v897
        %920 = vmatprep.subr.bf16.mxu0 0
        %921 = vmatpush1.bf16.msra.mxu0 %v898
        %922 = vmatprep.subr.bf16.mxu0 0
        %923 = vmatpush1.bf16.msra.mxu0 %v899
        %924 = vmatprep.subr.bf16.mxu0 0
        %925 = vmatpush1.bf16.msra.mxu0 0
        %926 = vmatprep.subr.bf16.mxu0 0
        %927 = vmatpush1.bf16.msra.mxu0 0
        %928 = vmatprep.subr.bf16.mxu0 0
        %929 = vmatpush1.bf16.msra.mxu0 0
        %930 = vmatprep.subr.bf16.mxu0 0
        %931 = vmatpush1.bf16.msra.mxu0 0
        %932 = vmatprep.subr.bf16.mxu0 0
        %933 = vmatpush1.bf16.msra.mxu0 0
        %934 = vmatprep.subr.bf16.mxu0 0
        %935 = vmatpush1.bf16.msra.mxu0 0
        %936 = vmatprep.subr.bf16.mxu0 0
        %937 = vmatpush1.bf16.msra.mxu0 0
        %938 = vmatprep.subr.bf16.mxu0 0
        %939 = vmatpush1.bf16.msra.mxu0 0
        %940 = vmatprep.mubr.bf16.mxu0 0
        %941 = vmatmul.mubr.bf16.gmra.mrb[0].mxu0 %v858
        %v942 = vpop.f32.mrb[0].mxu0
        %v943 = vadd.f32 0.0, %v942
        %v944 = vpop.f32.mrb[0].mxu0
        %v945 = vpop.f32.mrb[0].mxu0
        %v946 = vpop.f32.mrb[0].mxu0
        %947 = vdwg.mxu0
        %v948 = vadd.f32 %v835, %v943
        %v949 = vld [vmem:[%s4] sm:$0x1]
        %v951 = vlaneseq
        %v952 = vshrl.u32 %v951, 7
        %v953 = vsub.s32 0, %v952
        %v954 = vrot.slane %v949, %v953
        %v956 = vadd.f32 %v948, %v954
        %v957 = vadd.f32 %v270, %v956
        %958 = vst [vmem:[%s268] sm:$0xff] %v957
        %s959 = sand.u32 %s141, 1
        %s960 = scalar_lea.sflag [#allocation4], %s959
        %s961 = sand.u32 %s141, 1
        %s962 = smul.addr %s961, 8
        %s963 = scalar_lea.vmem [#allocation8], %s962
        // Predicated region
        $region53: #{tpu_custom_call.1} parent=39 // pred_check
          %p964 = pneg %p151
        $region54: #{tpu_custom_call.1} parent=39 // pred_check_branch
          %966 = sbr.rel (%p964) target = $region56
        $region55: #{tpu_custom_call.1} parent=39 // pred_region
          %s968 = ssub.s32 128, 128
          %969 = vsyncadd %s960, %s968
          %s970 = smul.addr %s23, 128
          %s971 = scalar_lea.hbm %s5, %s970
          %s973 = sshll.u32 %s963, 4
          %s974 = int_to_ptr.vmem [resolvable:$true] %s973
          %976 = dma.vmem_to_hbm [thread:$0]  %s974, 128, %s971, %s960
        $region56: #{tpu_custom_call.1} parent=39 // pred_fallthru
          _
      $region40: #{tpu_custom_call.1} parent=5 // pred_fallthru
        _
      %p977 = scmp.le.s32.totalorder 2, %s18
      // Predicated region
      $region57: #{tpu_custom_call.1} parent=5 // pred_check
        %p978 = pneg %p977
      $region58: #{tpu_custom_call.1} parent=5 // pred_check_branch
        %980 = sbr.rel (%p978) target = $region60
      $region59: #{tpu_custom_call.1} parent=5 // pred_region
        %s981 = ssub.s32 %s18, 2
        // Predicated region
        $region61: #{tpu_custom_call.1} parent=59 // pred_check
          %p982 = pneg %p157
        $region62: #{tpu_custom_call.1} parent=59 // pred_check_branch
          %984 = sbr.rel (%p982) target = $region64
        $region63: #{tpu_custom_call.1} parent=59 // pred_region
          %s985 = sand.u32 %s142, 1
          %s986 = scalar_lea.sflag [#allocation4], %s985
          %s987 = sand.u32 %s142, 1
          %s988 = smul.addr %s987, 8
          %s989 = scalar_lea.vmem [#allocation8], %s988
          %990 = dma.done %s986, 128
        $region64: #{tpu_custom_call.1} parent=59 // pred_fallthru
          _
      $region60: #{tpu_custom_call.1} parent=5 // pred_fallthru
        _
    $region6: #{tpu_custom_call.1} parent=1 // loop_footer
      %s22 = sadd.s32 1, %s18
    $region7: #{tpu_custom_call.1} parent=1 // loop_footer_branch
      %17 = sbr.rel target = $region3
    $region8: #{tpu_custom_call.1} parent=1 // loop_exit
      _
    %991 = vsyncpa [#allocation3], 1
    %s992 = scalar_lea.sflag [#allocation3], 1
    %993 = vsyncpa %s992, 1
    %994 = vsyncpa [#allocation6], 1
    %995 = vsyncpa [#allocation4], 1
    %s996 = scalar_lea.sflag [#allocation4], 1
    %997 = vsyncpa %s996, 1

</llo_original>
